<compile_context>
chip_gen: v6e
topology: v6e:2x2x1
jax: 0.10.0
libtpu: 0.0.40
codegen_flags: <defaults>
</compile_context>

<pallas_src>
import functools
import math

import jax
import jax.numpy as jnp
from jax.experimental import pallas as pl
from jax.experimental.pallas import tpu as pltpu


# Safe on v7x (64 MiB physical) while above the 32 MiB scoped default.
_VMEM_LIMIT = 48 * 1024 * 1024


def _round_up(x, m):
    return pl.cdiv(x, m) * m


# ----------------------------- Pallas kernels ------------------------------

def _matmul_stats_kernel(a_ref, w_ref, y_ref, sum_ref, sq_ref):
    # a: (tm, K) bf16   w: (K, N) bf16   y: (tm, N) bf16 (stats taken in f32).
    y = jnp.dot(a_ref[...], w_ref[...], preferred_element_type=jnp.float32)
    s = jnp.sum(y, axis=0, keepdims=True)
    q = jnp.sum(y * y, axis=0, keepdims=True)
    sum_ref[...] = jnp.broadcast_to(s, sum_ref.shape)
    sq_ref[...] = jnp.broadcast_to(q, sq_ref.shape)
    y_ref[...] = y.astype(y_ref.dtype)          # bf16: halves the y round-trip


def conv_matmul_with_stats(patches, w2d, *, tm=1024):
    """y = patches @ w2d on the MXU (bf16 out), plus per-column sum / sum-sq."""
    M, K = patches.shape
    N = w2d.shape[1]
    # >= 2 row tiles whenever M allows (v7x has 2 TensorCores, and it gives the
    # BlockSpec pipeline some depth); tiles are multiples of 16 (bf16 sublanes),
    # sized to avoid large zero-padding of the last tile.
    g = max(2, pl.cdiv(M, tm)) if M > 16 else 1
    tm_eff = _round_up(pl.cdiv(M, g), 16)
    m_pad = _round_up(M, tm_eff)
    if m_pad != M:
        # zero rows contribute 0 to the dot, the sum and the sum of squares.
        patches = jnp.pad(patches, ((0, m_pad - M), (0, 0)))
    grid_m = m_pad // tm_eff

    y, sums, sqs = pl.pallas_call(
        _matmul_stats_kernel,
        out_shape=(jax.ShapeDtypeStruct((m_pad, N), jnp.bfloat16),
                   jax.ShapeDtypeStruct((grid_m * 8, N), jnp.float32),
                   jax.ShapeDtypeStruct((grid_m * 8, N), jnp.float32)),
        grid=(grid_m,),
        in_specs=[pl.BlockSpec((tm_eff, K), lambda i: (i, 0)),
                  pl.BlockSpec((K, N), lambda i: (0, 0))],
        out_specs=(pl.BlockSpec((tm_eff, N), lambda i: (i, 0)),
                   pl.BlockSpec((8, N), lambda i: (i, 0)),
                   pl.BlockSpec((8, N), lambda i: (i, 0))),
        compiler_params=pltpu.CompilerParams(
            dimension_semantics=("parallel",),
            vmem_limit_bytes=_VMEM_LIMIT),
    )(patches.astype(jnp.bfloat16), w2d.astype(jnp.bfloat16))

    col_sum = jnp.sum(sums.reshape(grid_m, 8, N)[:, 0, :], axis=0)
    col_sq = jnp.sum(sqs.reshape(grid_m, 8, N)[:, 0, :], axis=0)
    return y[:M], col_sum, col_sq


def _scale_shift_kernel(x_ref, scale_ref, shift_ref, o_ref):
    o_ref[...] = x_ref[...].astype(jnp.float32) * scale_ref[...] + shift_ref[...]


def bn_apply(y, scale, shift, *, tm=2048):
    """Per-channel y*scale+shift; y is bf16, viewed lane-dense when possible."""
    M, N = y.shape
    lanes = 128
    if N < lanes and lanes % N == 0 and (M * N) % lanes == 0:
        reps = lanes // N
        x2 = y.reshape((M * N) // lanes, lanes)       # contiguous bf16 view
        sc = jnp.tile(scale, reps).reshape(1, lanes)
        sh = jnp.tile(shift, reps).reshape(1, lanes)
    else:
        x2 = y
        sc = scale.reshape(1, N)
        sh = shift.reshape(1, N)
    R, L = x2.shape
    g = max(2, pl.cdiv(R, tm)) if R > 16 else 1
    tr = _round_up(pl.cdiv(R, g), 16)
    r_pad = _round_up(R, tr)
    if r_pad != R:
        x2 = jnp.pad(x2, ((0, r_pad - R), (0, 0)))
    out = pl.pallas_call(
        _scale_shift_kernel,
        out_shape=jax.ShapeDtypeStruct((r_pad, L), jnp.float32),
        grid=(r_pad // tr,),
        in_specs=[pl.BlockSpec((tr, L), lambda i: (i, 0)),
                  pl.BlockSpec((1, L), lambda i: (0, 0)),
                  pl.BlockSpec((1, L), lambda i: (0, 0))],
        out_specs=pl.BlockSpec((tr, L), lambda i: (i, 0)),
        compiler_params=pltpu.CompilerParams(
            dimension_semantics=("parallel",),
            vmem_limit_bytes=_VMEM_LIMIT),
    )(x2, sc, sh)
    return out[:R].reshape(M, N)


def _pa_bn_kernel(x_ref, scale_ref, shift_ref, w_ref, b_ref, o_ref, pad_ref,
                  *, C, LEFT):
    # x_ref: (1, Ho, L=Wo*C) bf16, lane-dense.  scale/shift/b: (1, L) f32,
    # w_ref: (9, L) f32 (per-tap channel weights pre-tiled over W).
    # pad_ref: (Ho+2, LEFT+L+C) f32 scratch; interior lives at
    # rows [1, Ho+1), cols [LEFT, LEFT+L) so the interior store is lane-aligned.
    Ho, L = x_ref.shape[1], x_ref.shape[2]
    xn = x_ref[0].astype(jnp.float32) * scale_ref[...] + shift_ref[...]

    # Zero only the halo strips the 3x3 taps can read (never the whole scratch),
    # so every grid step is self-contained (keeps the batch axis "parallel").
    zrow = jnp.zeros((1, L + 2 * C), jnp.float32)
    zcol = jnp.zeros((Ho, C), jnp.float32)
    pad_ref[pl.ds(0, 1), pl.ds(LEFT - C, L + 2 * C)] = zrow
    pad_ref[pl.ds(Ho + 1, 1), pl.ds(LEFT - C, L + 2 * C)] = zrow
    pad_ref[pl.ds(1, Ho), pl.ds(LEFT - C, C)] = zcol
    pad_ref[pl.ds(1, Ho), pl.ds(LEFT + L, C)] = zcol
    pad_ref[pl.ds(1, Ho), pl.ds(LEFT, L)] = xn              # lane-aligned store

    acc = jnp.zeros((Ho, L), jnp.float32)
    for di in range(3):
        for dj in range(3):
            tap = pad_ref[pl.ds(di, Ho), pl.ds(LEFT + (dj - 1) * C, L)]
            acc = acc + tap * w_ref[pl.ds(di * 3 + dj, 1), :]
    gate = jax.nn.sigmoid(acc + b_ref[...])                  # EUP
    o_ref[0] = (xn * gate).astype(o_ref.dtype)


def pa_bn_forward(y_bhl, scale, shift, w_dw, b_dw, *, Wo):
    """Fused BN scale/shift + depthwise 3x3 PA conv + sigmoid gate."""
    B, Ho, L = y_bhl.shape
    C = scale.shape[0]
    LEFT = _round_up(C, 128)                  # lane-aligned interior offset
    scale_t = jnp.tile(scale, Wo).reshape(1, L)
    shift_t = jnp.tile(shift, Wo).reshape(1, L)
    b_t = jnp.tile(b_dw, Wo).reshape(1, L)
    w_t = jnp.tile(w_dw.reshape(9, C), (1, Wo))              # (9, L)
    kern = functools.partial(_pa_bn_kernel, C=C, LEFT=LEFT)
    # TODO(synk): for large Ho/Wo, tile over row-bands of Ho (grid=(B, bands))
    # with a 1-row halo so the per-step footprint stays small on v7x (64 MiB VMEM).
    return pl.pallas_call(
        kern,
        out_shape=jax.ShapeDtypeStruct((B, Ho, L), jnp.float32),
        grid=(B,),
        in_specs=[pl.BlockSpec((1, Ho, L), lambda b: (b, 0, 0)),
                  pl.BlockSpec((1, L), lambda b: (0, 0)),
                  pl.BlockSpec((1, L), lambda b: (0, 0)),
                  pl.BlockSpec((9, L), lambda b: (0, 0)),
                  pl.BlockSpec((1, L), lambda b: (0, 0))],
        out_specs=pl.BlockSpec((1, Ho, L), lambda b: (b, 0, 0)),
        scratch_shapes=[pltpu.VMEM((Ho + 2, LEFT + L + C), jnp.float32)],
        compiler_params=pltpu.CompilerParams(
            dimension_semantics=("parallel",),
            vmem_limit_bytes=_VMEM_LIMIT),
    )(y_bhl, scale_t, shift_t, w_t, b_t)


# ------------------------------ JAX glue ------------------------------------

def im2col(x_nhwc, k, stride, pad):
    """Extract (k,k) patches; tap axis adjacent to C so the reshape is contiguous.
    Column ordering is (kh, kw, C); the conv weight is reordered to match."""
    B, H, W, C = x_nhwc.shape
    Ho = (H + 2 * pad - k) // stride + 1
    Wo = (W + 2 * pad - k) // stride + 1
    xp = jnp.pad(x_nhwc, ((0, 0), (pad, pad), (pad, pad), (0, 0)))
    cols = []
    for di in range(k):
        for dj in range(k):
            cols.append(xp[:, di:di + stride * Ho:stride,
                           dj:dj + stride * Wo:stride, :])   # (B,Ho,Wo,C)
    p = jnp.stack(cols, axis=3)                               # (B,Ho,Wo,k*k,C)
    return p.reshape(B * Ho * Wo, k * k * C), Ho, Wo


def patch_embed_forward(x_nchw, params, *, patch_size, with_pos):
    B, C, H, W = x_nchw.shape
    k = patch_size + 1
    pad = patch_size // 2
    # Cast before im2col: halves the bytes moved by the pad/stack/reshape glue.
    x_nhwc = jnp.transpose(x_nchw, (0, 2, 3, 1)).astype(jnp.bfloat16)
    # TODO(synk): for large inputs, fuse im2col into the matmul kernel
    # (row-band the raw NHWC input with a halo and gather kxk taps in-kernel).
    patches, Ho, Wo = im2col(x_nhwc, k, patch_size, pad)

    out_ch = params["conv_w"].shape[0]
    # Weight reordered to the patches' (kh, kw, C) column order (tiny -> free).
    w2d = params["conv_w"].transpose(0, 2, 3, 1).reshape(out_ch, k * k * C).T
    # conv bias intentionally dropped: training-mode BN cancels it exactly.
    y, col_sum, col_sq = conv_matmul_with_stats(patches, w2d)

    # BatchNorm2d (training-mode semantics: biased batch stats over B,H,W).
    M = y.shape[0]
    mean = col_sum / M
    var = jnp.maximum(col_sq / M - mean * mean, 0.0)
    scale = params["bn_gamma"] * jax.lax.rsqrt(var + 1e-5)
    shift = params["bn_beta"] - mean * scale

    if with_pos:
        y_bhl = y.reshape(B, Ho, Wo * out_ch)                 # lane-dense view
        y_nhwc = pa_bn_forward(y_bhl, scale, shift,
                               params["pa_w"], params["pa_b"],
                               Wo=Wo).reshape(B, Ho, Wo, out_ch)
    else:
        y_nhwc = bn_apply(y, scale, shift).reshape(B, Ho, Wo, out_ch)

    x_out = jnp.transpose(y_nhwc, (0, 3, 1, 2))               # NCHW, like torch
    x_flat = y_nhwc.reshape(B, Ho * Wo, out_ch)               # flatten(2).T(1,2)
    return x_out, x_flat, (H // patch_size, W // patch_size)


def reference_forward(x_nchw, params, *, patch_size, with_pos):
    """Pure-JAX f32 reference (no Pallas) for correctness checking."""
    B, C, H, W = x_nchw.shape
    k = patch_size + 1
    pad = patch_size // 2
    x_nhwc = jnp.transpose(x_nchw, (0, 2, 3, 1))
    patches, Ho, Wo = im2col(x_nhwc, k, patch_size, pad)
    out_ch = params["conv_w"].shape[0]
    w2d = params["conv_w"].transpose(0, 2, 3, 1).reshape(out_ch, k * k * C).T
    y = jnp.dot(patches, w2d) + params["conv_b"]
    mean, var = jnp.mean(y, 0), jnp.var(y, 0)
    y = (y - mean) * jax.lax.rsqrt(var + 1e-5) * params["bn_gamma"] + params["bn_beta"]
    y_nhwc = y.reshape(B, Ho, Wo, out_ch)
    if with_pos:
        xp = jnp.pad(y_nhwc, ((0, 0), (1, 1), (1, 1), (0, 0)))
        acc = jnp.zeros_like(y_nhwc)
        for di in range(3):
            for dj in range(3):
                acc = acc + xp[:, di:di + Ho, dj:dj + Wo, :] * params["pa_w"][di, dj]
        y_nhwc = y_nhwc * jax.nn.sigmoid(acc + params["pa_b"])
    return (jnp.transpose(y_nhwc, (0, 3, 1, 2)),
            y_nhwc.reshape(B, Ho * Wo, out_ch),
            (H // patch_size, W // patch_size))


# --------------------------------- main --------------------------------------

if __name__ == "__main__":
    B, in_ch, H, W = 2, 4, 16, 16
    patch_size, out_ch = 4, 32
    k = patch_size + 1

    key = jax.random.PRNGKey(0)
    kx, kw, kb, kg, kbe, kpw, kpb = jax.random.split(key, 7)
    x = jax.random.normal(kx, (B, in_ch, H, W), jnp.float32)
    params = dict(
        # nn.Conv2d(in_ch, out_ch, k, stride=patch_size, padding=patch_size//2)
        conv_w=jax.random.normal(kw, (out_ch, in_ch, k, k), jnp.float32)
               * (1.0 / math.sqrt(in_ch * k * k)),
        conv_b=0.01 * jax.random.normal(kb, (out_ch,), jnp.float32),
        # nn.BatchNorm2d(out_ch) affine params
        bn_gamma=1.0 + 0.1 * jax.random.normal(kg, (out_ch,), jnp.float32),
        bn_beta=0.1 * jax.random.normal(kbe, (out_ch,), jnp.float32),
        # PA depthwise conv: torch weight (dim,1,3,3) stored here as (3,3,dim)
        pa_w=jax.random.normal(kpw, (3, 3, out_ch), jnp.float32) / 3.0,
        pa_b=0.01 * jax.random.normal(kpb, (out_ch,), jnp.float32),
    )

    for with_pos in (True, False):
        x_out, x_flat, (Hp, Wp) = patch_embed_forward(
            x, params, patch_size=patch_size, with_pos=with_pos)
        jax.block_until_ready((x_out, x_flat))

        r_out, r_flat, (rHp, rWp) = reference_forward(
            x, params, patch_size=patch_size, with_pos=with_pos)

        assert x_out.shape == (B, out_ch, H // patch_size, W // patch_size)
        assert x_flat.shape == (B, (H // patch_size) * (W // patch_size), out_ch)
        assert (Hp, Wp) == (rHp, rWp) == (H // patch_size, W // patch_size)
        assert jnp.allclose(x_out, r_out, rtol=2e-2, atol=2e-2), with_pos
        assert jnp.allclose(x_flat, r_flat, rtol=2e-2, atol=2e-2), with_pos

    print("KERNEL_OK")
</pallas_src>

<mosaic_0001>
module attributes {stable_mosaic.version = 11 : i64} {
  func.func @_matmul_stats_kernel(%arg0: i32, %arg1: memref<16x100xbf16, #tpu.memory_space<vmem>>, %arg2: memref<100x32xbf16, #tpu.memory_space<vmem>>, %arg3: memref<16x32xbf16, #tpu.memory_space<vmem>>, %arg4: memref<8x32xf32, #tpu.memory_space<vmem>>, %arg5: memref<8x32xf32, #tpu.memory_space<vmem>>) attributes {dimension_semantics = [#tpu.dimension_semantics<parallel>], iteration_bounds = array<i64: 2>, scalar_prefetch = 0 : i64, scratch_operands = 0 : i64, tpu.core_type = #tpu.core_type<tc>, window_params = [{transform_indices = @transform_0, window_bounds = array<i64: 16, 100>}, {pipeline_mode = #tpu.pipeline_mode<synchronous>, transform_indices = @transform_1, window_bounds = array<i64: 100, 32>}, {transform_indices = @transform_2, window_bounds = array<i64: 16, 32>}, {transform_indices = @transform_3, window_bounds = array<i64: 8, 32>}, {transform_indices = @transform_4, window_bounds = array<i64: 8, 32>}]} {
    %c0 = arith.constant 0 : index
    %c0_0 = arith.constant 0 : index
    %0 = vector.load %arg1[%c0, %c0_0] : memref<16x100xbf16, #tpu.memory_space<vmem>>, vector<16x100xbf16>
    %c0_1 = arith.constant 0 : index
    %c0_2 = arith.constant 0 : index
    %1 = vector.load %arg2[%c0_1, %c0_2] : memref<100x32xbf16, #tpu.memory_space<vmem>>, vector<100x32xbf16>
    %cst = arith.constant dense<0.000000e+00> : vector<16x32xf32>
    %2 = tpu.matmul %0, %1, %cst {dimension_numbers = #tpu.dot_dimension_numbers<[1], [0], [0], [1], [0, 0, 1, 1], [], []>} : vector<16x100xbf16>, vector<100x32xbf16>, vector<16x32xf32> -> vector<16x32xf32>
    %cst_3 = arith.constant dense<0.000000e+00> : vector<32xf32>
    %3 = vector.multi_reduction <add>, %2, %cst_3 [0] : vector<16x32xf32> to vector<32xf32>
    %4 = vector.shape_cast %3 : vector<32xf32> to vector<1x32xf32>
    %5 = arith.mulf %2, %2 : vector<16x32xf32>
    %cst_4 = arith.constant dense<0.000000e+00> : vector<32xf32>
    %6 = vector.multi_reduction <add>, %5, %cst_4 [0] : vector<16x32xf32> to vector<32xf32>
    %7 = vector.shape_cast %6 : vector<32xf32> to vector<1x32xf32>
    %8 = vector.shape_cast %4 : vector<1x32xf32> to vector<1x32xf32>
    %9 = vector.broadcast %8 : vector<1x32xf32> to vector<8x32xf32>
    %c0_5 = arith.constant 0 : index
    %c0_6 = arith.constant 0 : index
    %10 = vector.load %arg4[%c0_5, %c0_6] : memref<8x32xf32, #tpu.memory_space<vmem>>, vector<8x32xf32>
    tpu.vector_store %arg4[%c0_5, %c0_6], %9 {strides = array<i32>} : memref<8x32xf32, #tpu.memory_space<vmem>>, vector<8x32xf32>,
    %11 = vector.shape_cast %7 : vector<1x32xf32> to vector<1x32xf32>
    %12 = vector.broadcast %11 : vector<1x32xf32> to vector<8x32xf32>
    %c0_7 = arith.constant 0 : index
    %c0_8 = arith.constant 0 : index
    %13 = vector.load %arg5[%c0_7, %c0_8] : memref<8x32xf32, #tpu.memory_space<vmem>>, vector<8x32xf32>
    tpu.vector_store %arg5[%c0_7, %c0_8], %12 {strides = array<i32>} : memref<8x32xf32, #tpu.memory_space<vmem>>, vector<8x32xf32>,
    %14 = arith.truncf %2 : vector<16x32xf32> to vector<16x32xbf16>
    %c0_9 = arith.constant 0 : index
    %c0_10 = arith.constant 0 : index
    %15 = vector.load %arg3[%c0_9, %c0_10] : memref<16x32xbf16, #tpu.memory_space<vmem>>, vector<16x32xbf16>
    tpu.vector_store %arg3[%c0_9, %c0_10], %14 {strides = array<i32>} : memref<16x32xbf16, #tpu.memory_space<vmem>>, vector<16x32xbf16>,
    return
  }
  func.func @transform_0(%arg0: i32) -> (i32, i32) {
    %c0_i32 = arith.constant 0 : i32
    %c0_i32_0 = arith.constant 0 : i32
    return %arg0, %c0_i32 : i32, i32
  }
  func.func @transform_1(%arg0: i32) -> (i32, i32) {
    %c0_i32 = arith.constant 0 : i32
    %c0_i32_0 = arith.constant 0 : i32
    %c0_i32_1 = arith.constant 0 : i32
    return %c0_i32, %c0_i32_0 : i32, i32
  }
  func.func @transform_2(%arg0: i32) -> (i32, i32) {
    %c0_i32 = arith.constant 0 : i32
    %c0_i32_0 = arith.constant 0 : i32
    return %arg0, %c0_i32 : i32, i32
  }
  func.func @transform_3(%arg0: i32) -> (i32, i32) {
    %c0_i32 = arith.constant 0 : i32
    %c0_i32_0 = arith.constant 0 : i32
    return %arg0, %c0_i32 : i32, i32
  }
  func.func @transform_4(%arg0: i32) -> (i32, i32) {
    %c0_i32 = arith.constant 0 : i32
    %c0_i32_0 = arith.constant 0 : i32
    return %arg0, %c0_i32 : i32, i32
  }
}

</mosaic_0001>

<llo_original>
// kernel: tpu_custom_call.1
$region0: #{tpu_custom_call.1}
  #allocation0 [shape = 'u32[]', space=smem, size = 0x4, offset = 0x4, fixed_abs, tag = 'smem constant byte address 0x4 - core index']
  #allocation1 [shape = 'u32[144,128]{1,0:T(1,128)}', space=vmem, size = 0x12000, scoped, tag = 'internal scratch']
  %s0 = inlined_call_operand.vmem [shape: bf16[32,100], index: 0, kind: input, shape index: {}]
  %s1 = inlined_call_operand.vmem [shape: bf16[100,32], index: 1, kind: input, shape index: {}]
  %s2 = inlined_call_operand.hbm [shape: bf16[32,32], index: 2, kind: output, shape index: {0}]
  %s3 = inlined_call_operand.hbm [shape: f32[16,32], index: 3, kind: output, shape index: {1}]
  %s4 = inlined_call_operand.hbm [shape: f32[16,32], index: 4, kind: output, shape index: {2}]
  %5 = xla_tuple %s2, %s3, %s4
  %s6 = sld [smem:[#allocation0]]
  $region57: #{tpu_custom_call.1} parent=0
    _
  %s8 = ssub.s32 1, %s6
  %s9 = scalar_select 0, %s8, %s6
  $region1: #{tpu_custom_call.1} parent=0
    #allocation2 [shape = 'u8[8192]{0}', space=vmem, size = 0x2000, scoped, tag = 'output window, operand 0']
    #allocation3 [shape = 's32[2]{0}', space=sflag, size = 0x8, scoped, tag = 'scoped memory for tpu_custom_call.1']
    #allocation4 [shape = 'u8[8192]{0}', space=vmem, size = 0x2000, scoped, tag = 'output window, operand 1']
    #allocation5 [shape = 's32[2]{0}', space=sflag, size = 0x8, scoped, tag = 'scoped memory for tpu_custom_call.1']
    #allocation6 [shape = 'u8[8192]{0}', space=vmem, size = 0x2000, scoped, tag = 'output window, operand 2']
    %10 = vsyncpa [#allocation3], 0
    %s11 = scalar_lea.sflag [#allocation3], 1
    %12 = vsyncpa %s11, 0
    %13 = vsyncpa [#allocation5], 0
    %s14 = scalar_lea.sflag [#allocation5], 1
    %15 = vsyncpa %s14, 0
    loop: start=0, step=1, limit=4
    $region2: #{tpu_custom_call.1} parent=1 // loop_pre_header
      _
    $region3: #{tpu_custom_call.1} parent=1 // loop_header
      %s17 = sphi 0, %s21
      %p18 = scmp.ge.s32.totalorder %s17, 4
      %s27 = sphi 0, %s29
      %s30 = sphi 0, %s27
      %s31 = sphi 0, %s30
      %s47 = sphi 0, %s31
      %s51 = sphi 0, %s51
      %s53 = sphi 0, %s51
      %s54 = sphi 0, %s53
      %s68 = sphi 0, %s54
      %s74 = sphi 0, %s76
      %s77 = sphi 0, %s74
      %s78 = sphi 0, %s77
      %s94 = sphi 0, %s78
      %s100 = sphi 0, %s102
      %s103 = sphi 0, %s100
      %s104 = sphi 0, %s103
      %s120 = sphi 0, %s104
      %s126 = sphi 0, %s128
      %s129 = sphi 0, %s126
      %s130 = sphi 0, %s129
      %s146 = sphi 0, %s130
    $region4: #{tpu_custom_call.1} parent=1 // loop_header_branch
      %20 = sbr.rel (%p18) target = $region8
    $region5: #{tpu_custom_call.1} parent=1 // loop_body
      %s22 = ssub.s32 %s17, 1
      %s23 = ssub.s32 %s17, 2
      %s24 = sadd.s32 %s17, 1
      %s25 = ssub.s32 %s17, %s24
      %p26 = scmp.eq.s32.totalorder %s25, 0
      %s28 = sadd.s32 %s27, 1
      %s29 = scalar_select %p26, %s27, %s28
      %p32 = pneg %p26
      %p33 = scmp.eq.s32.totalorder %s17, 1
      %p34 = por %p32, %p33
      %p35 = scmp.ne.s32.totalorder %s27, %s30
      %p36 = scmp.eq.s32.totalorder %s17, 0
      %p37 = por %p35, %p36
      %p38 = scmp.ne.s32.totalorder %s27, %s30
      %p39 = scmp.eq.s32.totalorder %s22, 1
      %p40 = por %p38, %p39
      %p41 = scmp.ne.s32.totalorder %s30, %s31
      %p42 = scmp.eq.s32.totalorder %s22, 0
      %p43 = por %p41, %p42
      %p44 = scmp.ne.s32.totalorder %s30, %s31
      %p45 = scmp.eq.s32.totalorder %s23, 1
      %p46 = por %p44, %p45
      %p48 = scmp.ne.s32.totalorder %s31, %s47
      %p49 = scmp.eq.s32.totalorder %s23, 0
      %p50 = por %p48, %p49
      %s52 = sadd.s32 %s51, 1
      %p55 = scmp.eq.s32.totalorder %s17, 1
      %p56 = scmp.ne.s32.totalorder %s51, %s53
      %p57 = scmp.eq.s32.totalorder %s17, 0
      %p58 = por %p56, %p57
      %p59 = scmp.ne.s32.totalorder %s51, %s53
      %p60 = scmp.eq.s32.totalorder %s22, 1
      %p61 = por %p59, %p60
      %p62 = scmp.ne.s32.totalorder %s53, %s54
      %p63 = scmp.eq.s32.totalorder %s22, 0
      %p64 = por %p62, %p63
      %p65 = scmp.ne.s32.totalorder %s53, %s54
      %p66 = scmp.eq.s32.totalorder %s23, 1
      %p67 = por %p65, %p66
      %p69 = scmp.ne.s32.totalorder %s54, %s68
      %p70 = scmp.eq.s32.totalorder %s23, 0
      %p71 = por %p69, %p70
      %s72 = ssub.s32 %s17, %s24
      %p73 = scmp.eq.s32.totalorder %s72, 0
      %s75 = sadd.s32 %s74, 1
      %s76 = scalar_select %p73, %s74, %s75
      %p79 = pneg %p73
      %p80 = scmp.eq.s32.totalorder %s17, 1
      %p81 = por %p79, %p80
      %p82 = scmp.ne.s32.totalorder %s74, %s77
      %p83 = scmp.eq.s32.totalorder %s17, 0
      %p84 = por %p82, %p83
      %p85 = scmp.ne.s32.totalorder %s74, %s77
      %p86 = scmp.eq.s32.totalorder %s22, 1
      %p87 = por %p85, %p86
      %p88 = scmp.ne.s32.totalorder %s77, %s78
      %p89 = scmp.eq.s32.totalorder %s22, 0
      %p90 = por %p88, %p89
      %p91 = scmp.ne.s32.totalorder %s77, %s78
      %p92 = scmp.eq.s32.totalorder %s23, 1
      %p93 = por %p91, %p92
      %p95 = scmp.ne.s32.totalorder %s78, %s94
      %p96 = scmp.eq.s32.totalorder %s23, 0
      %p97 = por %p95, %p96
      %s98 = ssub.s32 %s17, %s24
      %p99 = scmp.eq.s32.totalorder %s98, 0
      %s101 = sadd.s32 %s100, 1
      %s102 = scalar_select %p99, %s100, %s101
      %p105 = pneg %p99
      %p106 = scmp.eq.s32.totalorder %s17, 1
      %p107 = por %p105, %p106
      %p108 = scmp.ne.s32.totalorder %s100, %s103
      %p109 = scmp.eq.s32.totalorder %s17, 0
      %p110 = por %p108, %p109
      %p111 = scmp.ne.s32.totalorder %s100, %s103
      %p112 = scmp.eq.s32.totalorder %s22, 1
      %p113 = por %p111, %p112
      %p114 = scmp.ne.s32.totalorder %s103, %s104
      %p115 = scmp.eq.s32.totalorder %s22, 0
      %p116 = por %p114, %p115
      %p117 = scmp.ne.s32.totalorder %s103, %s104
      %p118 = scmp.eq.s32.totalorder %s23, 1
      %p119 = por %p117, %p118
      %p121 = scmp.ne.s32.totalorder %s104, %s120
      %p122 = scmp.eq.s32.totalorder %s23, 0
      %p123 = por %p121, %p122
      %s124 = ssub.s32 %s17, %s24
      %p125 = scmp.eq.s32.totalorder %s124, 0
      %s127 = sadd.s32 %s126, 1
      %s128 = scalar_select %p125, %s126, %s127
      %p131 = pneg %p125
      %p132 = scmp.eq.s32.totalorder %s17, 1
      %p133 = por %p131, %p132
      %p134 = scmp.ne.s32.totalorder %s126, %s129
      %p135 = scmp.eq.s32.totalorder %s17, 0
      %p136 = por %p134, %p135
      %p137 = scmp.ne.s32.totalorder %s126, %s129
      %p138 = scmp.eq.s32.totalorder %s22, 1
      %p139 = por %p137, %p138
      %p140 = scmp.ne.s32.totalorder %s129, %s130
      %p141 = scmp.eq.s32.totalorder %s22, 0
      %p142 = por %p140, %p141
      %p143 = scmp.ne.s32.totalorder %s129, %s130
      %p144 = scmp.eq.s32.totalorder %s23, 1
      %p145 = por %p143, %p144
      %p147 = scmp.ne.s32.totalorder %s130, %s146
      %p148 = scmp.eq.s32.totalorder %s23, 0
      %p149 = por %p147, %p148
      %p150 = scmp.le.s32.totalorder 1, %s17
      %p151 = scmp.lt.s32.totalorder %s17, 3
      %p152 = pnand %p150, %p151
      %p153 = pneg %p152
      // Predicated region
      $region9: #{tpu_custom_call.1} parent=5 // pred_check
        _
      $region10: #{tpu_custom_call.1} parent=5 // pred_check_branch
        %155 = sbr.rel (%p152) target = $region12
      $region11: #{tpu_custom_call.1} parent=5 // pred_region
        %s156 = ssub.s32 %s17, 1
        // Predicated region
        $region13: #{tpu_custom_call.1} parent=11 // pred_check
          %p157 = pneg %p64
        $region14: #{tpu_custom_call.1} parent=11 // pred_check_branch
          %159 = sbr.rel (%p157) target = $region16
        $region15: #{tpu_custom_call.1} parent=11 // pred_region
          _
        $region16: #{tpu_custom_call.1} parent=11 // pred_fallthru
          _
      $region12: #{tpu_custom_call.1} parent=5 // pred_fallthru
        _
      %p160 = scmp.lt.s32.totalorder %s17, 2
      // Predicated region
      $region17: #{tpu_custom_call.1} parent=5 // pred_check
        %p161 = pneg %p160
      $region18: #{tpu_custom_call.1} parent=5 // pred_check_branch
        %163 = sbr.rel (%p161) target = $region20
      $region19: #{tpu_custom_call.1} parent=5 // pred_region
        // Predicated region
        $region21: #{tpu_custom_call.1} parent=19 // pred_check
          %p164 = pneg %p37
        $region22: #{tpu_custom_call.1} parent=19 // pred_check_branch
          %166 = sbr.rel (%p164) target = $region24
        $region23: #{tpu_custom_call.1} parent=19 // pred_region
          %s167 = smul.u32 2, %s17
          %p168 = scmp.lt.s32.totalorder %s167, 3
          %s169 = scalar_select %p168, %s167, 3
          %s170 = smul.addr %s169, 4
          %s171 = scalar_lea.vmem %s0, %s170
          %s172 = smul.u32 2, %s17
        $region24: #{tpu_custom_call.1} parent=19 // pred_fallthru
          _
      $region20: #{tpu_custom_call.1} parent=5 // pred_fallthru
        _
      %p173 = scmp.le.s32.totalorder 1, %s17
      %p174 = scmp.lt.s32.totalorder %s17, 3
      %p175 = pnand %p173, %p174
      %p176 = pneg %p175
      // Predicated region
      $region25: #{tpu_custom_call.1} parent=5 // pred_check
        _
      $region26: #{tpu_custom_call.1} parent=5 // pred_check_branch
        %178 = sbr.rel (%p175) target = $region28
      $region27: #{tpu_custom_call.1} parent=5 // pred_region
        %s179 = ssub.s32 %s17, 1
        %s180 = smul.u32 2, %s22
        %p181 = scmp.lt.s32.totalorder %s180, 3
        %s182 = scalar_select %p181, %s180, 3
        %s183 = smul.addr %s182, 4
        %s184 = scalar_lea.vmem %s0, %s183
        %p185 = pneg %p43
        %p186 = pneg %p40
        %p187 = pneg %p64
        %p188 = pneg %p61
        %p189 = pneg %p90
        %p190 = pneg %p87
        %s191 = sand.u32 %s77, 1
        %s192 = scalar_lea.sflag [#allocation3], %s191
        %s193 = sand.u32 %s77, 1
        %s194 = smul.addr %s193, 8
        %s195 = scalar_lea.vmem [#allocation2], %s194
        %p196 = pneg %p116
        %p197 = pneg %p113
        %s198 = sand.u32 %s22, 1
        %s199 = scalar_lea.sflag [#allocation5], %s198
        %s200 = sand.u32 %s103, 1
        %s201 = smul.addr %s200, 8
        %s202 = scalar_lea.vmem [#allocation4], %s201
        %p203 = pneg %p142
        %p204 = pneg %p139
        %s205 = sand.u32 %s22, 1
        %s206 = scalar_lea.sflag [#allocation5], %s205
        %s207 = sand.u32 %s129, 1
        %s208 = smul.addr %s207, 8
        %s209 = scalar_lea.vmem [#allocation6], %s208
        %s210 = smul.u32 2, %s22
        %p211 = scmp.lt.s32.totalorder %s210, 3
        %s212 = scalar_select %p211, %s210, 3
        %s213 = smul.addr %s212, 4
        %s214 = scalar_lea.vmem %s0, %s213
        %s215 = smul.u32 2, %s22
        %s216 = smul.u32 2, %s22
        %v218 = vld [vmem:[%s214] sm:$0xf]
        %v219 = vld [vmem:[%s214 + $0x4] sm:$0xf]
        %v220 = vld [vmem:[%s1] sm:$0xf]
        %v221 = vld [vmem:[%s1 + $0x4] sm:$0xf]
        %v222 = vld [vmem:[%s1 + $0x8] sm:$0xf]
        %v223 = vld [vmem:[%s1 + $0xc] sm:$0xf]
        %v224 = vld [vmem:[%s1 + $0x10] sm:$0xf]
        %v225 = vld [vmem:[%s1 + $0x14] sm:$0xf]
        %v226 = vld [vmem:[%s1 + $0x18] sm:$0xf]
        %v227 = vld [vmem:[%s1 + $0x1c] sm:$0xf]
        %v228 = vld [vmem:[%s1 + $0x20] sm:$0xf]
        %v229 = vld [vmem:[%s1 + $0x24] sm:$0xf]
        %v230 = vld [vmem:[%s1 + $0x28] sm:$0xf]
        %v231 = vld [vmem:[%s1 + $0x2c] sm:$0xf]
        %v232 = vld [vmem:[%s1 + $0x30] sm:$0x3]
        %v235 = vunpack.c.l.b16 %v218
        %v236 = vunpack.c.l.b16 %v219
        %v237 = vpack.c.b16 %v236, %v235
        %v251 = vunpack.c.l.b16 %v220
        %v252 = vunpack.c.l.b16 %v221
        %v253 = vunpack.c.l.b16 %v222
        %v254 = vunpack.c.l.b16 %v223
        %v255 = vunpack.c.l.b16 %v224
        %v256 = vunpack.c.l.b16 %v225
        %v257 = vunpack.c.l.b16 %v226
        %v258 = vunpack.c.l.b16 %v227
        %v259 = vunpack.c.l.b16 %v228
        %v260 = vunpack.c.l.b16 %v229
        %v261 = vunpack.c.l.b16 %v230
        %v262 = vunpack.c.l.b16 %v231
        %v263 = vunpack.c.l.b16 %v232
        %v264 = vpack.c.b16 %v252, %v251
        %v265 = vpack.c.b16 %v254, %v253
        %v266 = vpack.c.b16 %v256, %v255
        %v267 = vpack.c.b16 %v258, %v257
        %v268 = vpack.c.b16 %v260, %v259
        %v269 = vpack.c.b16 %v262, %v261
        %v270 = vpack.c.b16 %v263, %v263
        %vm277 = vcmask 818176
        %v279 = vsel %vm277, %v237, 0
        %vm281 = vcmask 1041408
        %v283 = vsel %vm281, %v270, 0
        %285 = vmatprep.subr.bf16.mxu0 0
        %286 = vmatpush1.bf16.msra.mxu0 0
        %287 = vmatprep.subr.bf16.mxu0 0
        %288 = vmatpush1.bf16.msra.mxu0 %v283
        %289 = vmatprep.subr.bf16.mxu0 0
        %290 = vmatpush1.bf16.msra.mxu0 %v269
        %291 = vmatprep.subr.bf16.mxu0 0
        %292 = vmatpush1.bf16.msra.mxu0 %v268
        %293 = vmatprep.subr.bf16.mxu0 0
        %294 = vmatpush1.bf16.msra.mxu0 %v267
        %295 = vmatprep.subr.bf16.mxu0 0
        %296 = vmatpush1.bf16.msra.mxu0 %v266
        %297 = vmatprep.subr.bf16.mxu0 0
        %298 = vmatpush1.bf16.msra.mxu0 %v265
        %299 = vmatprep.subr.bf16.mxu0 0
        %300 = vmatpush1.bf16.msra.mxu0 %v264
        %301 = vmatprep.subr.bf16.mxu0 0
        %302 = vmatpush2.bf16.msra.mxu0 0
        %303 = vmatprep.subr.bf16.mxu0 0
        %304 = vmatpush2.bf16.msra.mxu0 0
        %305 = vmatprep.subr.bf16.mxu0 0
        %306 = vmatpush2.bf16.msra.mxu0 0
        %307 = vmatprep.subr.bf16.mxu0 0
        %308 = vmatpush2.bf16.msra.mxu0 0
        %309 = vmatprep.subr.bf16.mxu0 0
        %310 = vmatpush2.bf16.msra.mxu0 0
        %311 = vmatprep.subr.bf16.mxu0 0
        %312 = vmatpush2.bf16.msra.mxu0 0
        %313 = vmatprep.subr.bf16.mxu0 0
        %314 = vmatpush2.bf16.msra.mxu0 0
        %315 = vmatprep.subr.bf16.mxu0 0
        %316 = vmatpush2.bf16.msra.mxu0 0
        %317 = vmatprep.mubr.bf16.mxu0 0
        %318 = vmatmul.mubr.bf16.gmra.mxu0 %v279
        %v319 = vpop.f32.mrf.mxu0
        %v320 = vadd.f32 0.0, %v319
        %v321 = vpop.f32.mrf.mxu0
        %v322 = vpop.f32.mrf.mxu0
        %v323 = vadd.f32 0.0, %v322
        %v324 = vpop.f32.mrf.mxu0
        %325 = vdwg.mxu0
        %vm326 = vcmask 261120
        %v327 = vsel %vm326, %v320, 0.0
        %v328 = vsel %vm326, %v323, 0.0
        %v329 = vadd.f32 %v327, %v328
        %v330 = vrot.slane %v329, 4
        %v331 = vadd.f32 %v329, %v330
        %v332 = vrot.slane %v331, 2
        %v333 = vadd.f32 %v331, %v332
        %v334 = vrot.slane %v333, 1
        %v335 = vadd.f32 %v333, %v334
        %v336 = vmul.f32 %v320, %v320
        %v337 = vmul.f32 %v323, %v323
        %v338 = vsel %vm326, %v336, 0.0
        %v339 = vsel %vm326, %v337, 0.0
        %v340 = vadd.f32 %v338, %v339
        %v341 = vrot.slane %v340, 4
        %v342 = vadd.f32 %v340, %v341
        %v343 = vrot.slane %v342, 2
        %v344 = vadd.f32 %v342, %v343
        %v345 = vrot.slane %v344, 1
        %v346 = vadd.f32 %v344, %v345
        %347 = vst.msk [vmem:[%s202] sm:$0xff] %vm326, %v335
        %348 = vst.msk [vmem:[%s209] sm:$0xff] %vm326, %v346
        %v349 = vpack.c.bf16 %v323, %v320
        %v351 = vunpack.c.l.b16 %v349
        %v352 = vunpack.c.h.b16 %v349
        %v353 = vpack.c.b16 %v351, %v351
        %v354 = vpack.c.b16 %v352, %v352
        %vm357 = vcmask 257024
        %358 = vst.msk [vmem:[%s195] sm:$0xf] %vm357, %v353
        %359 = vst.msk [vmem:[%s195 + $0x4] sm:$0xf] %vm357, %v354
        %s360 = sand.u32 %s77, 1
        %s361 = scalar_lea.sflag [#allocation3], %s360
        %s362 = sand.u32 %s77, 1
        %s363 = smul.addr %s362, 8
        %s364 = scalar_lea.vmem [#allocation2], %s363
        %s365 = sand.u32 %s22, 1
        %s366 = scalar_lea.sflag [#allocation5], %s365
        %s367 = sand.u32 %s103, 1
        %s368 = smul.addr %s367, 8
        %s369 = scalar_lea.vmem [#allocation4], %s368
        %s370 = sand.u32 %s22, 1
        %s371 = scalar_lea.sflag [#allocation5], %s370
        %s372 = sand.u32 %s129, 1
        %s373 = smul.addr %s372, 8
        %s374 = scalar_lea.vmem [#allocation6], %s373
        // Predicated region
        $region29: #{tpu_custom_call.1} parent=27 // pred_check
          %p375 = pneg %p87
        $region30: #{tpu_custom_call.1} parent=27 // pred_check_branch
          %377 = sbr.rel (%p375) target = $region32
        $region31: #{tpu_custom_call.1} parent=27 // pred_region
          %s378 = smul.u32 2, %s22
          %s380 = ssub.s32 128, 128
          %381 = vsyncadd %s361, %s380
          %s382 = smul.addr %s378, 64
          %s383 = scalar_lea.hbm %s2, %s382
          %s384 = sshll.u32 %s364, 4
          %s385 = int_to_ptr.vmem [resolvable:$true] %s384
          %390 = dma.vmem_to_hbm [thread:$0]  %s385, 128, %s383, %s361, 64, 64, 4
        $region32: #{tpu_custom_call.1} parent=27 // pred_fallthru
          _
        // Predicated region
        $region33: #{tpu_custom_call.1} parent=27 // pred_check
          %p391 = pneg %p113
        $region34: #{tpu_custom_call.1} parent=27 // pred_check_branch
          %393 = sbr.rel (%p391) target = $region36
        $region35: #{tpu_custom_call.1} parent=27 // pred_region
          %s395 = ssub.s32 128, 128
          %396 = vsyncadd %s366, %s395
          %s397 = smul.addr %s22, 128
          %s398 = scalar_lea.hbm %s3, %s397
          %s400 = sshll.u32 %s369, 4
          %s401 = int_to_ptr.vmem [resolvable:$true] %s400
          %403 = dma.vmem_to_hbm [thread:$0]  %s401, 128, %s398, %s366
        $region36: #{tpu_custom_call.1} parent=27 // pred_fallthru
          _
        // Predicated region
        $region37: #{tpu_custom_call.1} parent=27 // pred_check
          %p404 = pneg %p139
        $region38: #{tpu_custom_call.1} parent=27 // pred_check_branch
          %406 = sbr.rel (%p404) target = $region40
        $region39: #{tpu_custom_call.1} parent=27 // pred_region
          %s408 = ssub.s32 128, 128
          %409 = vsyncadd %s371, %s408
          %s410 = smul.addr %s22, 128
          %s411 = scalar_lea.hbm %s4, %s410
          %s413 = sshll.u32 %s374, 4
          %s414 = int_to_ptr.vmem [resolvable:$true] %s413
          %416 = dma.vmem_to_hbm [thread:$0]  %s414, 128, %s411, %s371
        $region40: #{tpu_custom_call.1} parent=27 // pred_fallthru
          _
      $region28: #{tpu_custom_call.1} parent=5 // pred_fallthru
        _
      %p417 = scmp.le.s32.totalorder 2, %s17
      // Predicated region
      $region41: #{tpu_custom_call.1} parent=5 // pred_check
        %p418 = pneg %p417
      $region42: #{tpu_custom_call.1} parent=5 // pred_check_branch
        %420 = sbr.rel (%p418) target = $region44
      $region43: #{tpu_custom_call.1} parent=5 // pred_region
        %s421 = ssub.s32 %s17, 2
        // Predicated region
        $region45: #{tpu_custom_call.1} parent=43 // pred_check
          %p422 = pneg %p93
        $region46: #{tpu_custom_call.1} parent=43 // pred_check_branch
          %424 = sbr.rel (%p422) target = $region48
        $region47: #{tpu_custom_call.1} parent=43 // pred_region
          %s425 = sand.u32 %s78, 1
          %s426 = scalar_lea.sflag [#allocation3], %s425
          %s427 = sand.u32 %s78, 1
          %s428 = smul.addr %s427, 8
          %s429 = scalar_lea.vmem [#allocation2], %s428
          %430 = dma.done %s426, 128
        $region48: #{tpu_custom_call.1} parent=43 // pred_fallthru
          _
        // Predicated region
        $region49: #{tpu_custom_call.1} parent=43 // pred_check
          %p431 = pneg %p119
        $region50: #{tpu_custom_call.1} parent=43 // pred_check_branch
          %433 = sbr.rel (%p431) target = $region52
        $region51: #{tpu_custom_call.1} parent=43 // pred_region
          %s434 = sand.u32 %s23, 1
          %s435 = scalar_lea.sflag [#allocation5], %s434
          %s436 = sand.u32 %s104, 1
          %s437 = smul.addr %s436, 8
          %s438 = scalar_lea.vmem [#allocation4], %s437
          %439 = dma.done %s435, 128
        $region52: #{tpu_custom_call.1} parent=43 // pred_fallthru
          _
        // Predicated region
        $region53: #{tpu_custom_call.1} parent=43 // pred_check
          %p440 = pneg %p145
        $region54: #{tpu_custom_call.1} parent=43 // pred_check_branch
          %442 = sbr.rel (%p440) target = $region56
        $region55: #{tpu_custom_call.1} parent=43 // pred_region
          %s443 = sand.u32 %s23, 1
          %s444 = scalar_lea.sflag [#allocation5], %s443
          %s445 = sand.u32 %s130, 1
          %s446 = smul.addr %s445, 8
          %s447 = scalar_lea.vmem [#allocation6], %s446
          %448 = dma.done %s444, 128
        $region56: #{tpu_custom_call.1} parent=43 // pred_fallthru
          _
      $region44: #{tpu_custom_call.1} parent=5 // pred_fallthru
        _
    $region6: #{tpu_custom_call.1} parent=1 // loop_footer
      %s21 = sadd.s32 1, %s17
    $region7: #{tpu_custom_call.1} parent=1 // loop_footer_branch
      %16 = sbr.rel target = $region3
    $region8: #{tpu_custom_call.1} parent=1 // loop_exit
      _
    %449 = vsyncpa [#allocation3], 1
    %s450 = scalar_lea.sflag [#allocation3], 1
    %451 = vsyncpa %s450, 1
    %452 = vsyncpa [#allocation5], 1
    %s453 = scalar_lea.sflag [#allocation5], 1
    %454 = vsyncpa %s453, 1

</llo_original>
